<compile_context>
chip_gen: v5e
topology: v5e:2x2
jax: 0.10.0
libtpu: 0.0.40
codegen_flags: <defaults>
</compile_context>

<pallas_src>
import jax
import jax.numpy as jnp
import numpy as np
from jax import lax
from jax.experimental import pallas as pl
from jax.experimental.pallas import tpu as pltpu


def _lstm_kernel(len_ref, x_ref, wih_ref, whh_ref, b_ref, wfc_ref, bfc_ref,
                 out_ref):
    """Single-invocation LSTM-over-time + final Linear.

    len_ref : (B, 1)  int32   valid lengths
    x_ref   : (S*B, E) f32    embedded tokens, timestep-major
    wih_ref : (E, 4H) f32     input->gates weights (gate order i, f, g, o)
    whh_ref : (H, 4H) f32     hidden->gates weights
    b_ref   : (1, 4H) f32     b_ih + b_hh
    wfc_ref : (H, Opad) f32   final Linear weights (lane padded)
    bfc_ref : (1, Opad) f32   final Linear bias   (lane padded)
    out_ref : (B, Opad) f32
    """
    B = len_ref.shape[0]
    SB, _ = x_ref.shape
    S = SB // B
    H = whh_ref.shape[0]

    # Hoisted input projection for all timesteps: one well-shaped MXU matmul,
    # bias broadcast done exactly once.
    xw = (jnp.dot(x_ref[...], wih_ref[...],
                  preferred_element_type=jnp.float32)
          + b_ref[...])                                   # (S*B, 4H)

    whh = whh_ref[...]                                    # (H, 4H)
    lengths = len_ref[...]                                # (B, 1) int32

    h = jnp.zeros((B, H), jnp.float32)
    c = jnp.zeros((B, H), jnp.float32)

    # Fully unrolled time recurrence; h/c stay register/vreg resident.
    for t in range(S):
        gates = (xw[t * B:(t + 1) * B, :]
                 + jnp.dot(h, whh, preferred_element_type=jnp.float32))  # (B,4H)

        sig = jax.nn.sigmoid(gates)          # one full-vreg EUP pass
        tnh = jnp.tanh(gates)                # one full-vreg EUP pass
        i_g = sig[:, 0 * H:1 * H]
        f_g = sig[:, 1 * H:2 * H]
        g_g = tnh[:, 2 * H:3 * H]
        o_g = sig[:, 3 * H:4 * H]

        c_new = f_g * c + i_g * g_g
        h_new = o_g * jnp.tanh(c_new)

        valid = lengths > t                  # (B, 1) bool; last-valid-step mask
        h = jnp.where(valid, h_new, h)
        c = jnp.where(valid, c_new, c)

    # Final Linear into a lane-dense (B, 128) slab.
    out_ref[...] = (jnp.dot(h, wfc_ref[...],
                            preferred_element_type=jnp.float32)
                    + bfc_ref[...])


def rnn_forward(text, text_length, params):
    """text: (seq_len, batch) int32; text_length: (batch,) int32."""
    emb = params["embedding"]            # (vocab, E)
    w_ih = params["w_ih"]                # (E, 4H)
    w_hh = params["w_hh"]                # (H, 4H)
    bias = params["bias"]                # (1, 4H)  (b_ih + b_hh)
    w_fc = params["w_fc"]                # (H, O)
    b_fc = params["b_fc"]                # (1, O)

    seq_len, batch = text.shape
    H = w_hh.shape[0]
    O = w_fc.shape[1]
    LANES = 128
    O_pad = ((O + LANES - 1) // LANES) * LANES

    # Glue: embedding lookup (gather) in XLA; flatten to timestep-major rows.
    x2d = jnp.take(emb, text.reshape(-1), axis=0).astype(jnp.float32)  # (S*B, E)
    lengths = text_length.astype(jnp.int32).reshape(batch, 1)          # (B, 1)

    # Lane-dense FC weights: zero-pad output columns to 128 lanes.
    w_fc_p = jnp.zeros((H, O_pad), jnp.float32).at[:, :O].set(w_fc)
    b_fc_p = jnp.zeros((1, O_pad), jnp.float32).at[:, :O].set(b_fc)

    vmem = pl.BlockSpec(memory_space=pltpu.MemorySpace.VMEM)
    out_padded = pl.pallas_call(
        _lstm_kernel,
        out_shape=jax.ShapeDtypeStruct((batch, O_pad), jnp.float32),
        in_specs=[vmem] * 7,
        out_specs=vmem,
    )(lengths, x2d, w_ih, w_hh, bias, w_fc_p, b_fc_p)

    return out_padded[:, :O]


def rnn_forward_ref(text, text_length, params):
    """Pure-JAX reference with the same math order (for correctness check)."""
    emb = params["embedding"]
    x = jnp.take(emb, text, axis=0).astype(jnp.float32)       # (S, B, E)
    S, B, _ = x.shape
    H = params["w_hh"].shape[0]
    xw = x @ params["w_ih"] + params["bias"]                   # (S, B, 4H)

    def step(carry, inp):
        h, c = carry
        xwt, mt = inp                                          # (B,4H), (B,1) bool
        gates = xwt + h @ params["w_hh"]
        i_g = jax.nn.sigmoid(gates[:, 0 * H:1 * H])
        f_g = jax.nn.sigmoid(gates[:, 1 * H:2 * H])
        g_g = jnp.tanh(gates[:, 2 * H:3 * H])
        o_g = jax.nn.sigmoid(gates[:, 3 * H:4 * H])
        c_new = f_g * c + i_g * g_g
        h_new = o_g * jnp.tanh(c_new)
        h = jnp.where(mt, h_new, h)
        c = jnp.where(mt, c_new, c)
        return (h, c), None

    t_idx = jnp.arange(S, dtype=jnp.int32)[:, None]
    mask = (t_idx < text_length[None, :])[:, :, None]          # (S, B, 1) bool
    (h, _), _ = lax.scan(step, (jnp.zeros((B, H)), jnp.zeros((B, H))), (xw, mask))
    return h @ params["w_fc"] + params["b_fc"]


def make_params(key, input_dim, embedding_dim, hidden_dim, output_dim):
    ks = jax.random.split(key, 7)
    s_lstm = 1.0 / np.sqrt(hidden_dim)
    s_fc = 1.0 / np.sqrt(hidden_dim)
    w_ih = jax.random.uniform(ks[1], (4 * hidden_dim, embedding_dim),
                              minval=-s_lstm, maxval=s_lstm)
    w_hh = jax.random.uniform(ks[2], (4 * hidden_dim, hidden_dim),
                              minval=-s_lstm, maxval=s_lstm)
    b_ih = jax.random.uniform(ks[3], (4 * hidden_dim,), minval=-s_lstm, maxval=s_lstm)
    b_hh = jax.random.uniform(ks[4], (4 * hidden_dim,), minval=-s_lstm, maxval=s_lstm)
    w_fc = jax.random.uniform(ks[5], (output_dim, hidden_dim), minval=-s_fc, maxval=s_fc)
    b_fc = jax.random.uniform(ks[6], (output_dim,), minval=-s_fc, maxval=s_fc)
    return {
        "embedding": jax.random.normal(ks[0], (input_dim, embedding_dim),
                                       dtype=jnp.float32),
        # Stored transposed for (B, in) @ (in, out) matmuls in the kernel.
        "w_ih": w_ih.T.astype(jnp.float32),                   # (E, 4H)
        "w_hh": w_hh.T.astype(jnp.float32),                   # (H, 4H)
        "bias": (b_ih + b_hh)[None, :].astype(jnp.float32),   # (1, 4H)
        "w_fc": w_fc.T.astype(jnp.float32),                   # (H, O)
        "b_fc": b_fc[None, :].astype(jnp.float32),            # (1, O)
    }


if __name__ == "__main__":
    input_dim = 50       # vocab size
    embedding_dim = 16
    hidden_dim = 32
    output_dim = 4
    seq_len = 8
    batch = 8

    key = jax.random.PRNGKey(0)
    k_par, k_txt = jax.random.split(key)
    params = make_params(k_par, input_dim, embedding_dim, hidden_dim, output_dim)

    text = jax.random.randint(k_txt, (seq_len, batch), 0, input_dim, dtype=jnp.int32)
    # Lengths sorted descending (pack_padded_sequence enforce_sorted=True semantics).
    text_length = jnp.array([8, 8, 7, 6, 5, 4, 3, 2], dtype=jnp.int32)

    out = rnn_forward(text, text_length, params)
    out = jax.block_until_ready(out)

    ref = rnn_forward_ref(text, text_length, params)
    np.testing.assert_allclose(np.asarray(out), np.asarray(ref),
                               rtol=2e-5, atol=2e-5)
    print("KERNEL_OK")
</pallas_src>

<mosaic_0001>
module attributes {stable_mosaic.version = 11 : i64} {
  func.func @_lstm_kernel(%arg0: memref<8x1xi32, #tpu.memory_space<vmem>>, %arg1: memref<64x16xf32, #tpu.memory_space<vmem>>, %arg2: memref<16x128xf32, #tpu.memory_space<vmem>>, %arg3: memref<32x128xf32, #tpu.memory_space<vmem>>, %arg4: memref<1x128xf32, #tpu.memory_space<vmem>>, %arg5: memref<32x128xf32, #tpu.memory_space<vmem>>, %arg6: memref<1x128xf32, #tpu.memory_space<vmem>>, %arg7: memref<8x128xf32, #tpu.memory_space<vmem>>) attributes {dimension_semantics = [], scalar_prefetch = 0 : i64, scratch_operands = 0 : i64, tpu.core_type = #tpu.core_type<tc>} {
    %c0 = arith.constant 0 : index
    %c0_0 = arith.constant 0 : index
    %0 = vector.load %arg1[%c0, %c0_0] : memref<64x16xf32, #tpu.memory_space<vmem>>, vector<64x16xf32>
    %c0_1 = arith.constant 0 : index
    %c0_2 = arith.constant 0 : index
    %1 = vector.load %arg2[%c0_1, %c0_2] : memref<16x128xf32, #tpu.memory_space<vmem>>, vector<16x128xf32>
    %cst = arith.constant dense<0.000000e+00> : vector<64x128xf32>
    %2 = tpu.matmul %0, %1, %cst {dimension_numbers = #tpu.dot_dimension_numbers<[1], [0], [0], [1], [0, 0, 1, 1], [], []>} : vector<64x16xf32>, vector<16x128xf32>, vector<64x128xf32> -> vector<64x128xf32>
    %c0_3 = arith.constant 0 : index
    %c0_4 = arith.constant 0 : index
    %3 = vector.load %arg4[%c0_3, %c0_4] : memref<1x128xf32, #tpu.memory_space<vmem>>, vector<1x128xf32>
    %4 = vector.broadcast %3 : vector<1x128xf32> to vector<64x128xf32>
    %5 = arith.addf %2, %4 : vector<64x128xf32>
    %c0_5 = arith.constant 0 : index
    %c0_6 = arith.constant 0 : index
    %6 = vector.load %arg3[%c0_5, %c0_6] : memref<32x128xf32, #tpu.memory_space<vmem>>, vector<32x128xf32>
    %c0_7 = arith.constant 0 : index
    %c0_8 = arith.constant 0 : index
    %7 = vector.load %arg0[%c0_7, %c0_8] : memref<8x1xi32, #tpu.memory_space<vmem>>, vector<8x1xi32>
    %cst_9 = arith.constant 0.000000e+00 : f32
    %8 = vector.broadcast %cst_9 : f32 to vector<8x32xf32>
    %cst_10 = arith.constant 0.000000e+00 : f32
    %9 = vector.broadcast %cst_10 : f32 to vector<8x32xf32>
    %10 = vector.extract_strided_slice %5 {offsets = [0, 0], sizes = [8, 128], strides = [1, 1]} : vector<64x128xf32> to vector<8x128xf32>
    %cst_11 = arith.constant dense<0.000000e+00> : vector<8x128xf32>
    %11 = tpu.matmul %8, %6, %cst_11 {dimension_numbers = #tpu.dot_dimension_numbers<[1], [0], [0], [1], [0, 0, 1, 1], [], []>} : vector<8x32xf32>, vector<32x128xf32>, vector<8x128xf32> -> vector<8x128xf32>
    %12 = arith.addf %10, %11 : vector<8x128xf32>
    %13 = arith.negf %12 : vector<8x128xf32>
    %14 = math.exp %13 : vector<8x128xf32>
    %cst_12 = arith.constant 1.000000e+00 : f32
    %15 = vector.broadcast %cst_12 : f32 to vector<8x128xf32>
    %16 = arith.addf %15, %14 : vector<8x128xf32>
    %17 = arith.divf %15, %16 : vector<8x128xf32>
    %18 = math.tanh %12 : vector<8x128xf32>
    %19 = vector.extract_strided_slice %17 {offsets = [0, 0], sizes = [8, 32], strides = [1, 1]} : vector<8x128xf32> to vector<8x32xf32>
    %20 = vector.extract_strided_slice %17 {offsets = [0, 32], sizes = [8, 32], strides = [1, 1]} : vector<8x128xf32> to vector<8x32xf32>
    %21 = vector.extract_strided_slice %18 {offsets = [0, 64], sizes = [8, 32], strides = [1, 1]} : vector<8x128xf32> to vector<8x32xf32>
    %22 = vector.extract_strided_slice %17 {offsets = [0, 96], sizes = [8, 32], strides = [1, 1]} : vector<8x128xf32> to vector<8x32xf32>
    %23 = arith.mulf %20, %9 : vector<8x32xf32>
    %24 = arith.mulf %19, %21 : vector<8x32xf32>
    %25 = arith.addf %23, %24 : vector<8x32xf32>
    %26 = math.tanh %25 : vector<8x32xf32>
    %27 = arith.mulf %22, %26 : vector<8x32xf32>
    %c0_i32 = arith.constant 0 : i32
    %28 = vector.broadcast %c0_i32 : i32 to vector<8x1xi32>
    %29 = arith.cmpi sgt, %7, %28 : vector<8x1xi32>
    %30 = vector.shape_cast %29 : vector<8x1xi1> to vector<8x1xi1>
    %31 = vector.broadcast %30 : vector<8x1xi1> to vector<8x32xi1>
    %32 = arith.select %31, %27, %8 : vector<8x32xi1>, vector<8x32xf32>
    %33 = vector.shape_cast %29 : vector<8x1xi1> to vector<8x1xi1>
    %34 = vector.broadcast %33 : vector<8x1xi1> to vector<8x32xi1>
    %35 = arith.select %34, %25, %9 : vector<8x32xi1>, vector<8x32xf32>
    %36 = vector.extract_strided_slice %5 {offsets = [8, 0], sizes = [8, 128], strides = [1, 1]} : vector<64x128xf32> to vector<8x128xf32>
    %cst_13 = arith.constant dense<0.000000e+00> : vector<8x128xf32>
    %37 = tpu.matmul %32, %6, %cst_13 {dimension_numbers = #tpu.dot_dimension_numbers<[1], [0], [0], [1], [0, 0, 1, 1], [], []>} : vector<8x32xf32>, vector<32x128xf32>, vector<8x128xf32> -> vector<8x128xf32>
    %38 = arith.addf %36, %37 : vector<8x128xf32>
    %39 = arith.negf %38 : vector<8x128xf32>
    %40 = math.exp %39 : vector<8x128xf32>
    %cst_14 = arith.constant 1.000000e+00 : f32
    %41 = vector.broadcast %cst_14 : f32 to vector<8x128xf32>
    %42 = arith.addf %41, %40 : vector<8x128xf32>
    %43 = arith.divf %41, %42 : vector<8x128xf32>
    %44 = math.tanh %38 : vector<8x128xf32>
    %45 = vector.extract_strided_slice %43 {offsets = [0, 0], sizes = [8, 32], strides = [1, 1]} : vector<8x128xf32> to vector<8x32xf32>
    %46 = vector.extract_strided_slice %43 {offsets = [0, 32], sizes = [8, 32], strides = [1, 1]} : vector<8x128xf32> to vector<8x32xf32>
    %47 = vector.extract_strided_slice %44 {offsets = [0, 64], sizes = [8, 32], strides = [1, 1]} : vector<8x128xf32> to vector<8x32xf32>
    %48 = vector.extract_strided_slice %43 {offsets = [0, 96], sizes = [8, 32], strides = [1, 1]} : vector<8x128xf32> to vector<8x32xf32>
    %49 = arith.mulf %46, %35 : vector<8x32xf32>
    %50 = arith.mulf %45, %47 : vector<8x32xf32>
    %51 = arith.addf %49, %50 : vector<8x32xf32>
    %52 = math.tanh %51 : vector<8x32xf32>
    %53 = arith.mulf %48, %52 : vector<8x32xf32>
    %c1_i32 = arith.constant 1 : i32
    %54 = vector.broadcast %c1_i32 : i32 to vector<8x1xi32>
    %55 = arith.cmpi sgt, %7, %54 : vector<8x1xi32>
    %56 = vector.shape_cast %55 : vector<8x1xi1> to vector<8x1xi1>
    %57 = vector.broadcast %56 : vector<8x1xi1> to vector<8x32xi1>
    %58 = arith.select %57, %53, %32 : vector<8x32xi1>, vector<8x32xf32>
    %59 = vector.shape_cast %55 : vector<8x1xi1> to vector<8x1xi1>
    %60 = vector.broadcast %59 : vector<8x1xi1> to vector<8x32xi1>
    %61 = arith.select %60, %51, %35 : vector<8x32xi1>, vector<8x32xf32>
    %62 = vector.extract_strided_slice %5 {offsets = [16, 0], sizes = [8, 128], strides = [1, 1]} : vector<64x128xf32> to vector<8x128xf32>
    %cst_15 = arith.constant dense<0.000000e+00> : vector<8x128xf32>
    %63 = tpu.matmul %58, %6, %cst_15 {dimension_numbers = #tpu.dot_dimension_numbers<[1], [0], [0], [1], [0, 0, 1, 1], [], []>} : vector<8x32xf32>, vector<32x128xf32>, vector<8x128xf32> -> vector<8x128xf32>
    %64 = arith.addf %62, %63 : vector<8x128xf32>
    %65 = arith.negf %64 : vector<8x128xf32>
    %66 = math.exp %65 : vector<8x128xf32>
    %cst_16 = arith.constant 1.000000e+00 : f32
    %67 = vector.broadcast %cst_16 : f32 to vector<8x128xf32>
    %68 = arith.addf %67, %66 : vector<8x128xf32>
    %69 = arith.divf %67, %68 : vector<8x128xf32>
    %70 = math.tanh %64 : vector<8x128xf32>
    %71 = vector.extract_strided_slice %69 {offsets = [0, 0], sizes = [8, 32], strides = [1, 1]} : vector<8x128xf32> to vector<8x32xf32>
    %72 = vector.extract_strided_slice %69 {offsets = [0, 32], sizes = [8, 32], strides = [1, 1]} : vector<8x128xf32> to vector<8x32xf32>
    %73 = vector.extract_strided_slice %70 {offsets = [0, 64], sizes = [8, 32], strides = [1, 1]} : vector<8x128xf32> to vector<8x32xf32>
    %74 = vector.extract_strided_slice %69 {offsets = [0, 96], sizes = [8, 32], strides = [1, 1]} : vector<8x128xf32> to vector<8x32xf32>
    %75 = arith.mulf %72, %61 : vector<8x32xf32>
    %76 = arith.mulf %71, %73 : vector<8x32xf32>
    %77 = arith.addf %75, %76 : vector<8x32xf32>
    %78 = math.tanh %77 : vector<8x32xf32>
    %79 = arith.mulf %74, %78 : vector<8x32xf32>
    %c2_i32 = arith.constant 2 : i32
    %80 = vector.broadcast %c2_i32 : i32 to vector<8x1xi32>
    %81 = arith.cmpi sgt, %7, %80 : vector<8x1xi32>
    %82 = vector.shape_cast %81 : vector<8x1xi1> to vector<8x1xi1>
    %83 = vector.broadcast %82 : vector<8x1xi1> to vector<8x32xi1>
    %84 = arith.select %83, %79, %58 : vector<8x32xi1>, vector<8x32xf32>
    %85 = vector.shape_cast %81 : vector<8x1xi1> to vector<8x1xi1>
    %86 = vector.broadcast %85 : vector<8x1xi1> to vector<8x32xi1>
    %87 = arith.select %86, %77, %61 : vector<8x32xi1>, vector<8x32xf32>
    %88 = vector.extract_strided_slice %5 {offsets = [24, 0], sizes = [8, 128], strides = [1, 1]} : vector<64x128xf32> to vector<8x128xf32>
    %cst_17 = arith.constant dense<0.000000e+00> : vector<8x128xf32>
    %89 = tpu.matmul %84, %6, %cst_17 {dimension_numbers = #tpu.dot_dimension_numbers<[1], [0], [0], [1], [0, 0, 1, 1], [], []>} : vector<8x32xf32>, vector<32x128xf32>, vector<8x128xf32> -> vector<8x128xf32>
    %90 = arith.addf %88, %89 : vector<8x128xf32>
    %91 = arith.negf %90 : vector<8x128xf32>
    %92 = math.exp %91 : vector<8x128xf32>
    %cst_18 = arith.constant 1.000000e+00 : f32
    %93 = vector.broadcast %cst_18 : f32 to vector<8x128xf32>
    %94 = arith.addf %93, %92 : vector<8x128xf32>
    %95 = arith.divf %93, %94 : vector<8x128xf32>
    %96 = math.tanh %90 : vector<8x128xf32>
    %97 = vector.extract_strided_slice %95 {offsets = [0, 0], sizes = [8, 32], strides = [1, 1]} : vector<8x128xf32> to vector<8x32xf32>
    %98 = vector.extract_strided_slice %95 {offsets = [0, 32], sizes = [8, 32], strides = [1, 1]} : vector<8x128xf32> to vector<8x32xf32>
    %99 = vector.extract_strided_slice %96 {offsets = [0, 64], sizes = [8, 32], strides = [1, 1]} : vector<8x128xf32> to vector<8x32xf32>
    %100 = vector.extract_strided_slice %95 {offsets = [0, 96], sizes = [8, 32], strides = [1, 1]} : vector<8x128xf32> to vector<8x32xf32>
    %101 = arith.mulf %98, %87 : vector<8x32xf32>
    %102 = arith.mulf %97, %99 : vector<8x32xf32>
    %103 = arith.addf %101, %102 : vector<8x32xf32>
    %104 = math.tanh %103 : vector<8x32xf32>
    %105 = arith.mulf %100, %104 : vector<8x32xf32>
    %c3_i32 = arith.constant 3 : i32
    %106 = vector.broadcast %c3_i32 : i32 to vector<8x1xi32>
    %107 = arith.cmpi sgt, %7, %106 : vector<8x1xi32>
    %108 = vector.shape_cast %107 : vector<8x1xi1> to vector<8x1xi1>
    %109 = vector.broadcast %108 : vector<8x1xi1> to vector<8x32xi1>
    %110 = arith.select %109, %105, %84 : vector<8x32xi1>, vector<8x32xf32>
    %111 = vector.shape_cast %107 : vector<8x1xi1> to vector<8x1xi1>
    %112 = vector.broadcast %111 : vector<8x1xi1> to vector<8x32xi1>
    %113 = arith.select %112, %103, %87 : vector<8x32xi1>, vector<8x32xf32>
    %114 = vector.extract_strided_slice %5 {offsets = [32, 0], sizes = [8, 128], strides = [1, 1]} : vector<64x128xf32> to vector<8x128xf32>
    %cst_19 = arith.constant dense<0.000000e+00> : vector<8x128xf32>
    %115 = tpu.matmul %110, %6, %cst_19 {dimension_numbers = #tpu.dot_dimension_numbers<[1], [0], [0], [1], [0, 0, 1, 1], [], []>} : vector<8x32xf32>, vector<32x128xf32>, vector<8x128xf32> -> vector<8x128xf32>
    %116 = arith.addf %114, %115 : vector<8x128xf32>
    %117 = arith.negf %116 : vector<8x128xf32>
    %118 = math.exp %117 : vector<8x128xf32>
    %cst_20 = arith.constant 1.000000e+00 : f32
    %119 = vector.broadcast %cst_20 : f32 to vector<8x128xf32>
    %120 = arith.addf %119, %118 : vector<8x128xf32>
    %121 = arith.divf %119, %120 : vector<8x128xf32>
    %122 = math.tanh %116 : vector<8x128xf32>
    %123 = vector.extract_strided_slice %121 {offsets = [0, 0], sizes = [8, 32], strides = [1, 1]} : vector<8x128xf32> to vector<8x32xf32>
    %124 = vector.extract_strided_slice %121 {offsets = [0, 32], sizes = [8, 32], strides = [1, 1]} : vector<8x128xf32> to vector<8x32xf32>
    %125 = vector.extract_strided_slice %122 {offsets = [0, 64], sizes = [8, 32], strides = [1, 1]} : vector<8x128xf32> to vector<8x32xf32>
    %126 = vector.extract_strided_slice %121 {offsets = [0, 96], sizes = [8, 32], strides = [1, 1]} : vector<8x128xf32> to vector<8x32xf32>
    %127 = arith.mulf %124, %113 : vector<8x32xf32>
    %128 = arith.mulf %123, %125 : vector<8x32xf32>
    %129 = arith.addf %127, %128 : vector<8x32xf32>
    %130 = math.tanh %129 : vector<8x32xf32>
    %131 = arith.mulf %126, %130 : vector<8x32xf32>
    %c4_i32 = arith.constant 4 : i32
    %132 = vector.broadcast %c4_i32 : i32 to vector<8x1xi32>
    %133 = arith.cmpi sgt, %7, %132 : vector<8x1xi32>
    %134 = vector.shape_cast %133 : vector<8x1xi1> to vector<8x1xi1>
    %135 = vector.broadcast %134 : vector<8x1xi1> to vector<8x32xi1>
    %136 = arith.select %135, %131, %110 : vector<8x32xi1>, vector<8x32xf32>
    %137 = vector.shape_cast %133 : vector<8x1xi1> to vector<8x1xi1>
    %138 = vector.broadcast %137 : vector<8x1xi1> to vector<8x32xi1>
    %139 = arith.select %138, %129, %113 : vector<8x32xi1>, vector<8x32xf32>
    %140 = vector.extract_strided_slice %5 {offsets = [40, 0], sizes = [8, 128], strides = [1, 1]} : vector<64x128xf32> to vector<8x128xf32>
    %cst_21 = arith.constant dense<0.000000e+00> : vector<8x128xf32>
    %141 = tpu.matmul %136, %6, %cst_21 {dimension_numbers = #tpu.dot_dimension_numbers<[1], [0], [0], [1], [0, 0, 1, 1], [], []>} : vector<8x32xf32>, vector<32x128xf32>, vector<8x128xf32> -> vector<8x128xf32>
    %142 = arith.addf %140, %141 : vector<8x128xf32>
    %143 = arith.negf %142 : vector<8x128xf32>
    %144 = math.exp %143 : vector<8x128xf32>
    %cst_22 = arith.constant 1.000000e+00 : f32
    %145 = vector.broadcast %cst_22 : f32 to vector<8x128xf32>
    %146 = arith.addf %145, %144 : vector<8x128xf32>
    %147 = arith.divf %145, %146 : vector<8x128xf32>
    %148 = math.tanh %142 : vector<8x128xf32>
    %149 = vector.extract_strided_slice %147 {offsets = [0, 0], sizes = [8, 32], strides = [1, 1]} : vector<8x128xf32> to vector<8x32xf32>
    %150 = vector.extract_strided_slice %147 {offsets = [0, 32], sizes = [8, 32], strides = [1, 1]} : vector<8x128xf32> to vector<8x32xf32>
    %151 = vector.extract_strided_slice %148 {offsets = [0, 64], sizes = [8, 32], strides = [1, 1]} : vector<8x128xf32> to vector<8x32xf32>
    %152 = vector.extract_strided_slice %147 {offsets = [0, 96], sizes = [8, 32], strides = [1, 1]} : vector<8x128xf32> to vector<8x32xf32>
    %153 = arith.mulf %150, %139 : vector<8x32xf32>
    %154 = arith.mulf %149, %151 : vector<8x32xf32>
    %155 = arith.addf %153, %154 : vector<8x32xf32>
    %156 = math.tanh %155 : vector<8x32xf32>
    %157 = arith.mulf %152, %156 : vector<8x32xf32>
    %c5_i32 = arith.constant 5 : i32
    %158 = vector.broadcast %c5_i32 : i32 to vector<8x1xi32>
    %159 = arith.cmpi sgt, %7, %158 : vector<8x1xi32>
    %160 = vector.shape_cast %159 : vector<8x1xi1> to vector<8x1xi1>
    %161 = vector.broadcast %160 : vector<8x1xi1> to vector<8x32xi1>
    %162 = arith.select %161, %157, %136 : vector<8x32xi1>, vector<8x32xf32>
    %163 = vector.shape_cast %159 : vector<8x1xi1> to vector<8x1xi1>
    %164 = vector.broadcast %163 : vector<8x1xi1> to vector<8x32xi1>
    %165 = arith.select %164, %155, %139 : vector<8x32xi1>, vector<8x32xf32>
    %166 = vector.extract_strided_slice %5 {offsets = [48, 0], sizes = [8, 128], strides = [1, 1]} : vector<64x128xf32> to vector<8x128xf32>
    %cst_23 = arith.constant dense<0.000000e+00> : vector<8x128xf32>
    %167 = tpu.matmul %162, %6, %cst_23 {dimension_numbers = #tpu.dot_dimension_numbers<[1], [0], [0], [1], [0, 0, 1, 1], [], []>} : vector<8x32xf32>, vector<32x128xf32>, vector<8x128xf32> -> vector<8x128xf32>
    %168 = arith.addf %166, %167 : vector<8x128xf32>
    %169 = arith.negf %168 : vector<8x128xf32>
    %170 = math.exp %169 : vector<8x128xf32>
    %cst_24 = arith.constant 1.000000e+00 : f32
    %171 = vector.broadcast %cst_24 : f32 to vector<8x128xf32>
    %172 = arith.addf %171, %170 : vector<8x128xf32>
    %173 = arith.divf %171, %172 : vector<8x128xf32>
    %174 = math.tanh %168 : vector<8x128xf32>
    %175 = vector.extract_strided_slice %173 {offsets = [0, 0], sizes = [8, 32], strides = [1, 1]} : vector<8x128xf32> to vector<8x32xf32>
    %176 = vector.extract_strided_slice %173 {offsets = [0, 32], sizes = [8, 32], strides = [1, 1]} : vector<8x128xf32> to vector<8x32xf32>
    %177 = vector.extract_strided_slice %174 {offsets = [0, 64], sizes = [8, 32], strides = [1, 1]} : vector<8x128xf32> to vector<8x32xf32>
    %178 = vector.extract_strided_slice %173 {offsets = [0, 96], sizes = [8, 32], strides = [1, 1]} : vector<8x128xf32> to vector<8x32xf32>
    %179 = arith.mulf %176, %165 : vector<8x32xf32>
    %180 = arith.mulf %175, %177 : vector<8x32xf32>
    %181 = arith.addf %179, %180 : vector<8x32xf32>
    %182 = math.tanh %181 : vector<8x32xf32>
    %183 = arith.mulf %178, %182 : vector<8x32xf32>
    %c6_i32 = arith.constant 6 : i32
    %184 = vector.broadcast %c6_i32 : i32 to vector<8x1xi32>
    %185 = arith.cmpi sgt, %7, %184 : vector<8x1xi32>
    %186 = vector.shape_cast %185 : vector<8x1xi1> to vector<8x1xi1>
    %187 = vector.broadcast %186 : vector<8x1xi1> to vector<8x32xi1>
    %188 = arith.select %187, %183, %162 : vector<8x32xi1>, vector<8x32xf32>
    %189 = vector.shape_cast %185 : vector<8x1xi1> to vector<8x1xi1>
    %190 = vector.broadcast %189 : vector<8x1xi1> to vector<8x32xi1>
    %191 = arith.select %190, %181, %165 : vector<8x32xi1>, vector<8x32xf32>
    %192 = vector.extract_strided_slice %5 {offsets = [56, 0], sizes = [8, 128], strides = [1, 1]} : vector<64x128xf32> to vector<8x128xf32>
    %cst_25 = arith.constant dense<0.000000e+00> : vector<8x128xf32>
    %193 = tpu.matmul %188, %6, %cst_25 {dimension_numbers = #tpu.dot_dimension_numbers<[1], [0], [0], [1], [0, 0, 1, 1], [], []>} : vector<8x32xf32>, vector<32x128xf32>, vector<8x128xf32> -> vector<8x128xf32>
    %194 = arith.addf %192, %193 : vector<8x128xf32>
    %195 = arith.negf %194 : vector<8x128xf32>
    %196 = math.exp %195 : vector<8x128xf32>
    %cst_26 = arith.constant 1.000000e+00 : f32
    %197 = vector.broadcast %cst_26 : f32 to vector<8x128xf32>
    %198 = arith.addf %197, %196 : vector<8x128xf32>
    %199 = arith.divf %197, %198 : vector<8x128xf32>
    %200 = math.tanh %194 : vector<8x128xf32>
    %201 = vector.extract_strided_slice %199 {offsets = [0, 0], sizes = [8, 32], strides = [1, 1]} : vector<8x128xf32> to vector<8x32xf32>
    %202 = vector.extract_strided_slice %199 {offsets = [0, 32], sizes = [8, 32], strides = [1, 1]} : vector<8x128xf32> to vector<8x32xf32>
    %203 = vector.extract_strided_slice %200 {offsets = [0, 64], sizes = [8, 32], strides = [1, 1]} : vector<8x128xf32> to vector<8x32xf32>
    %204 = vector.extract_strided_slice %199 {offsets = [0, 96], sizes = [8, 32], strides = [1, 1]} : vector<8x128xf32> to vector<8x32xf32>
    %205 = arith.mulf %202, %191 : vector<8x32xf32>
    %206 = arith.mulf %201, %203 : vector<8x32xf32>
    %207 = arith.addf %205, %206 : vector<8x32xf32>
    %208 = math.tanh %207 : vector<8x32xf32>
    %209 = arith.mulf %204, %208 : vector<8x32xf32>
    %c7_i32 = arith.constant 7 : i32
    %210 = vector.broadcast %c7_i32 : i32 to vector<8x1xi32>
    %211 = arith.cmpi sgt, %7, %210 : vector<8x1xi32>
    %212 = vector.shape_cast %211 : vector<8x1xi1> to vector<8x1xi1>
    %213 = vector.broadcast %212 : vector<8x1xi1> to vector<8x32xi1>
    %214 = arith.select %213, %209, %188 : vector<8x32xi1>, vector<8x32xf32>
    %c0_27 = arith.constant 0 : index
    %c0_28 = arith.constant 0 : index
    %215 = vector.load %arg5[%c0_27, %c0_28] : memref<32x128xf32, #tpu.memory_space<vmem>>, vector<32x128xf32>
    %cst_29 = arith.constant dense<0.000000e+00> : vector<8x128xf32>
    %216 = tpu.matmul %214, %215, %cst_29 {dimension_numbers = #tpu.dot_dimension_numbers<[1], [0], [0], [1], [0, 0, 1, 1], [], []>} : vector<8x32xf32>, vector<32x128xf32>, vector<8x128xf32> -> vector<8x128xf32>
    %c0_30 = arith.constant 0 : index
    %c0_31 = arith.constant 0 : index
    %217 = vector.load %arg6[%c0_30, %c0_31] : memref<1x128xf32, #tpu.memory_space<vmem>>, vector<1x128xf32>
    %218 = vector.broadcast %217 : vector<1x128xf32> to vector<8x128xf32>
    %219 = arith.addf %216, %218 : vector<8x128xf32>
    %c0_32 = arith.constant 0 : index
    %c0_33 = arith.constant 0 : index
    %220 = vector.load %arg7[%c0_32, %c0_33] : memref<8x128xf32, #tpu.memory_space<vmem>>, vector<8x128xf32>
    tpu.vector_store %arg7[%c0_32, %c0_33], %219 {strides = array<i32>} : memref<8x128xf32, #tpu.memory_space<vmem>>, vector<8x128xf32>,
    return
  }
}

</mosaic_0001>

<llo_original>
// kernel: tpu_custom_call.1
$region0: #{tpu_custom_call.1}
  #allocation0 [shape = 'u32[]', space=smem, size = 0x4, offset = 0x4, fixed_abs, tag = 'smem constant byte address 0x4 - core index']
  #allocation1 [shape = 'u32[72,128]{1,0:T(1,128)}', space=vmem, size = 0x9000, scoped, tag = 'internal scratch']
  %s0 = inlined_call_operand.vmem [shape: s32[8,1], index: 0, kind: input, shape index: {}]
  %s1 = inlined_call_operand.vmem [shape: f32[64,16], index: 1, kind: input, shape index: {}]
  %s2 = inlined_call_operand.vmem [shape: f32[16,128], index: 2, kind: input, shape index: {}]
  %s3 = inlined_call_operand.vmem [shape: f32[32,128], index: 3, kind: input, shape index: {}]
  %s4 = inlined_call_operand.vmem [shape: f32[1,128], index: 4, kind: input, shape index: {}]
  %s5 = inlined_call_operand.vmem [shape: f32[32,128], index: 5, kind: input, shape index: {}]
  %s6 = inlined_call_operand.vmem [shape: f32[1,128], index: 6, kind: input, shape index: {}]
  %s7 = inlined_call_operand.hbm [shape: f32[8,128], index: 7, kind: output, shape index: {}]
  %s8 = sld [smem:[#allocation0]]
  $region38: #{tpu_custom_call.1} parent=0
    _
  %s10 = ssub.s32 1, %s8
  %s11 = scalar_select 0, %s10, %s8
  $region1: #{tpu_custom_call.1} parent=0
    #allocation2 [shape = 'u8[4096]{0}', space=vmem, size = 0x1000, scoped, tag = 'output window, operand 0, single buffered']
    #allocation3 [shape = 's32[1]{0}', space=sflag, size = 0x4, scoped, tag = 'scoped memory for tpu_custom_call.1']
    %12 = vsyncpa [#allocation3], 0
    // Predicated region
    $region2: #{tpu_custom_call.1} parent=1 // pred_check
      _
    $region3: #{tpu_custom_call.1} parent=1 // pred_check_branch
      %14 = sbr.rel (0) target = $region5
    $region4: #{tpu_custom_call.1} parent=1 // pred_region
      _
    $region5: #{tpu_custom_call.1} parent=1 // pred_fallthru
      _
    // Predicated region
    $region6: #{tpu_custom_call.1} parent=1 // pred_check
      _
    $region7: #{tpu_custom_call.1} parent=1 // pred_check_branch
      %16 = sbr.rel (0) target = $region9
    $region8: #{tpu_custom_call.1} parent=1 // pred_region
      _
    $region9: #{tpu_custom_call.1} parent=1 // pred_fallthru
      _
    // Predicated region
    $region10: #{tpu_custom_call.1} parent=1 // pred_check
      _
    $region11: #{tpu_custom_call.1} parent=1 // pred_check_branch
      %18 = sbr.rel (0) target = $region13
    $region12: #{tpu_custom_call.1} parent=1 // pred_region
      _
    $region13: #{tpu_custom_call.1} parent=1 // pred_fallthru
      _
    // Predicated region
    $region14: #{tpu_custom_call.1} parent=1 // pred_check
      _
    $region15: #{tpu_custom_call.1} parent=1 // pred_check_branch
      %20 = sbr.rel (0) target = $region17
    $region16: #{tpu_custom_call.1} parent=1 // pred_region
      _
    $region17: #{tpu_custom_call.1} parent=1 // pred_fallthru
      _
    // Predicated region
    $region18: #{tpu_custom_call.1} parent=1 // pred_check
      _
    $region19: #{tpu_custom_call.1} parent=1 // pred_check_branch
      %22 = sbr.rel (0) target = $region21
    $region20: #{tpu_custom_call.1} parent=1 // pred_region
      _
    $region21: #{tpu_custom_call.1} parent=1 // pred_fallthru
      _
    // Predicated region
    $region22: #{tpu_custom_call.1} parent=1 // pred_check
      _
    $region23: #{tpu_custom_call.1} parent=1 // pred_check_branch
      %24 = sbr.rel (0) target = $region25
    $region24: #{tpu_custom_call.1} parent=1 // pred_region
      _
    $region25: #{tpu_custom_call.1} parent=1 // pred_fallthru
      _
    // Predicated region
    $region26: #{tpu_custom_call.1} parent=1 // pred_check
      _
    $region27: #{tpu_custom_call.1} parent=1 // pred_check_branch
      %26 = sbr.rel (0) target = $region29
    $region28: #{tpu_custom_call.1} parent=1 // pred_region
      _
    $region29: #{tpu_custom_call.1} parent=1 // pred_fallthru
      _
    %v27 = vld [vmem:[%s1] sm:$0xff]
    %v28 = vld [vmem:[%s1 + $0x8] sm:$0xff]
    %v29 = vld [vmem:[%s1 + $0x10] sm:$0xff]
    %v30 = vld [vmem:[%s1 + $0x18] sm:$0xff]
    %v31 = vld [vmem:[%s1 + $0x20] sm:$0xff]
    %v32 = vld [vmem:[%s1 + $0x28] sm:$0xff]
    %v33 = vld [vmem:[%s1 + $0x30] sm:$0xff]
    %v34 = vld [vmem:[%s1 + $0x38] sm:$0xff]
    %v35 = vld [vmem:[%s2] sm:$0xff]
    %v36 = vld [vmem:[%s2 + $0x8] sm:$0xff]
    %v37 = vld [vmem:[%s4] sm:$0x1]
    %v39 = vperm.slane %v37, 0
    %vm41 = vcmask 130048
    %v43 = vsel %vm41, %v27, 0
    %v46 = vsel %vm41, %v28, 0
    %v49 = vsel %vm41, %v29, 0
    %v52 = vsel %vm41, %v30, 0
    %v55 = vsel %vm41, %v31, 0
    %v58 = vsel %vm41, %v32, 0
    %v61 = vsel %vm41, %v33, 0
    %v64 = vsel %vm41, %v34, 0
    %66 = vmatpush.msra.mxu0 0.0
    %67 = vmatpush.msra.mxu0 0.0
    %68 = vmatpush.msra.mxu0 0.0
    %69 = vmatpush.msra.mxu0 0.0
    %70 = vmatpush.msra.mxu0 0.0
    %71 = vmatpush.msra.mxu0 0.0
    %72 = vmatpush.msra.mxu0 0.0
    %73 = vmatpush.msra.mxu0 0.0
    %74 = vmatpush.msra.mxu0 0.0
    %75 = vmatpush.msra.mxu0 0.0
    %76 = vmatpush.msra.mxu0 0.0
    %77 = vmatpush.msra.mxu0 0.0
    %78 = vmatpush.msra.mxu0 0.0
    %79 = vmatpush.msra.mxu0 0.0
    %80 = vmatpush.msra.mxu0 %v36
    %81 = vmatpush.msra.mxu0 %v35
    %82 = vmatmul.f32.gmra.mxu0 %v43
    %v83 = vpop.f32.mrf.mxu0
    %v84 = vadd.f32 %v39, %v83
    %85 = vmatmul.f32.gmra.mxu0 %v46
    %v86 = vpop.f32.mrf.mxu0
    %v87 = vadd.f32 %v39, %v86
    %88 = vmatmul.f32.gmra.mxu0 %v49
    %v89 = vpop.f32.mrf.mxu0
    %v90 = vadd.f32 %v39, %v89
    %91 = vmatmul.f32.gmra.mxu0 %v52
    %v92 = vpop.f32.mrf.mxu0
    %v93 = vadd.f32 %v39, %v92
    %94 = vmatmul.f32.gmra.mxu0 %v55
    %v95 = vpop.f32.mrf.mxu0
    %v96 = vadd.f32 %v39, %v95
    %97 = vmatmul.f32.gmra.mxu0 %v58
    %v98 = vpop.f32.mrf.mxu0
    %v99 = vadd.f32 %v39, %v98
    %100 = vmatmul.f32.gmra.mxu0 %v61
    %v101 = vpop.f32.mrf.mxu0
    %v102 = vadd.f32 %v39, %v101
    %103 = vmatmul.f32.gmra.mxu0 %v64
    %v104 = vpop.f32.mrf.mxu0
    %v105 = vadd.f32 %v39, %v104
    %106 = vdwg.mxu0
    %v107 = vld [vmem:[%s3] sm:$0xff]
    %v108 = vld [vmem:[%s3 + $0x8] sm:$0xff]
    %v109 = vld [vmem:[%s3 + $0x10] sm:$0xff]
    %v110 = vld [vmem:[%s3 + $0x18] sm:$0xff]
    %v111 = vld [vmem:[%s0] sm:$0xff]
    %vm112 = vcmask 261120
    %v114 = vsel %vm112, 0.0, 0
    %116 = vmatpush.msra.mxu0 0.0
    %117 = vmatpush.msra.mxu0 0.0
    %118 = vmatpush.msra.mxu0 0.0
    %119 = vmatpush.msra.mxu0 0.0
    %120 = vmatpush.msra.mxu0 0.0
    %121 = vmatpush.msra.mxu0 0.0
    %122 = vmatpush.msra.mxu0 0.0
    %123 = vmatpush.msra.mxu0 0.0
    %124 = vmatpush.msra.mxu0 0.0
    %125 = vmatpush.msra.mxu0 0.0
    %126 = vmatpush.msra.mxu0 0.0
    %127 = vmatpush.msra.mxu0 0.0
    %128 = vmatpush.msra.mxu0 %v110
    %129 = vmatpush.msra.mxu0 %v109
    %130 = vmatpush.msra.mxu0 %v108
    %131 = vmatpush.msra.mxu0 %v107
    %132 = vmatmul.f32.gmra.mxu0 %v114
    %v133 = vpop.f32.mrf.mxu0
    %v134 = vadd.f32 0.0, %v133
    %135 = vdwg.mxu0
    %v136 = vadd.f32 %v84, %v134
    %v137 = vxor.u32 %v136, 2147483648
    %v138 = vmul.f32 %v137, 1.442695
    %v139 = vpow.pop %v138
    %v140 = vadd.f32 %v139, 1.0
    %v141 = vrcp.pop %v140
    %v142 = vmul.f32 %v140, %v141
    %v143 = vsub.f32 1.0, %v142
    %v144 = vmul.f32 %v141, %v143
    %v145 = vadd.f32 %v141, %v144
    %vm146 = vweird.f32 %v140
    %vm147 = vweird.f32 %v141
    %vm148 = vmor %vm146, %vm147
    %v149 = vsel %vm148, %v141, %v145
    %v150 = vand.u32 2147483647, %v140
    %vm151 = vcmp.eq.f32.partialorder %v150, 8.507059e+37
    %v152 = vand.u32 %v140, 2147483648
    %v153 = vor.u32 1.1754944e-38, %v152
    %v154 = vsel %vm151, %v153, %v149
    %v155 = vmul.f32 1.0, %v154
    %v156 = vtanh.pop %v136
    %v157 = vmul.f32 %v155, 0.0
    %159 = vrot.lane.b32.xlu0 %v156, 64
    %v160 = vpop.permute.xlu0 %159
    %v162 = vmul.f32 %v155, %v160
    %164 = vrot.lane.b32.xlu0 %v162, 32
    %v165 = vpop.permute.xlu0 %164
    %v167 = vadd.f32 %v157, %v165
    %v168 = vtanh.pop %v167
    %170 = vrot.lane.b32.xlu0 %v168, 64
    %v171 = vpop.permute.xlu0 %170
    %v173 = vmul.f32 %v155, %v171
    %vm174 = vcmp.gt.s32.totalorder %v111, 0
    %v175 = vsel %vm174, 1, 0
    %176 = vset.pattern.permute.xlu0 0
    %177 = vperm.xlu0 %176, %v175
    %v178 = vpop.permute.xlu0 %177
    %vm179 = vcmp.eq.s32.totalorder %v178, 1
    %v180 = vsel %vm179, %v173, 0.0
    %v181 = vsel %vm179, %v167, 0.0
    %183 = vrot.lane.b32.xlu0 %v180, 32
    %v184 = vpop.permute.xlu0 %183
    %v185 = vsel %vm112, %v184, 0
    %187 = vmatpush.msra.mxu0 0.0
    %188 = vmatpush.msra.mxu0 0.0
    %189 = vmatpush.msra.mxu0 0.0
    %190 = vmatpush.msra.mxu0 0.0
    %191 = vmatpush.msra.mxu0 0.0
    %192 = vmatpush.msra.mxu0 0.0
    %193 = vmatpush.msra.mxu0 0.0
    %194 = vmatpush.msra.mxu0 0.0
    %195 = vmatpush.msra.mxu0 0.0
    %196 = vmatpush.msra.mxu0 0.0
    %197 = vmatpush.msra.mxu0 0.0
    %198 = vmatpush.msra.mxu0 0.0
    %199 = vmatpush.msra.mxu0 %v110
    %200 = vmatpush.msra.mxu0 %v109
    %201 = vmatpush.msra.mxu0 %v108
    %202 = vmatpush.msra.mxu0 %v107
    %203 = vmatmul.f32.gmra.mxu0 %v185
    %v204 = vpop.f32.mrf.mxu0
    %v205 = vadd.f32 0.0, %v204
    %206 = vdwg.mxu0
    %v207 = vadd.f32 %v87, %v205
    %v208 = vxor.u32 %v207, 2147483648
    %v209 = vmul.f32 %v208, 1.442695
    %v210 = vpow.pop %v209
    %v211 = vadd.f32 %v210, 1.0
    %v212 = vrcp.pop %v211
    %v213 = vmul.f32 %v211, %v212
    %v214 = vsub.f32 1.0, %v213
    %v215 = vmul.f32 %v212, %v214
    %v216 = vadd.f32 %v212, %v215
    %vm217 = vweird.f32 %v211
    %vm218 = vweird.f32 %v212
    %vm219 = vmor %vm217, %vm218
    %v220 = vsel %vm219, %v212, %v216
    %v221 = vand.u32 2147483647, %v211
    %vm222 = vcmp.eq.f32.partialorder %v221, 8.507059e+37
    %v223 = vand.u32 %v211, 2147483648
    %v224 = vor.u32 1.1754944e-38, %v223
    %v225 = vsel %vm222, %v224, %v220
    %v226 = vmul.f32 1.0, %v225
    %v227 = vtanh.pop %v207
    %v228 = vmul.f32 %v226, %v181
    %230 = vrot.lane.b32.xlu0 %v227, 64
    %v231 = vpop.permute.xlu0 %230
    %v233 = vmul.f32 %v226, %v231
    %235 = vrot.lane.b32.xlu0 %v233, 32
    %v236 = vpop.permute.xlu0 %235
    %v238 = vadd.f32 %v228, %v236
    %v239 = vtanh.pop %v238
    %241 = vrot.lane.b32.xlu0 %v239, 64
    %v242 = vpop.permute.xlu0 %241
    %v244 = vmul.f32 %v226, %v242
    %vm245 = vcmp.gt.s32.totalorder %v111, 1
    %v246 = vsel %vm245, 1, 0
    %247 = vset.pattern.permute.xlu0 0
    %248 = vperm.xlu0 %247, %v246
    %v249 = vpop.permute.xlu0 %248
    %vm250 = vcmp.eq.s32.totalorder %v249, 1
    %v251 = vsel %vm250, %v244, %v180
    %v252 = vsel %vm250, %v238, %v181
    %254 = vrot.lane.b32.xlu0 %v251, 32
    %v255 = vpop.permute.xlu0 %254
    %v256 = vsel %vm112, %v255, 0
    %258 = vmatpush.msra.mxu0 0.0
    %259 = vmatpush.msra.mxu0 0.0
    %260 = vmatpush.msra.mxu0 0.0
    %261 = vmatpush.msra.mxu0 0.0
    %262 = vmatpush.msra.mxu0 0.0
    %263 = vmatpush.msra.mxu0 0.0
    %264 = vmatpush.msra.mxu0 0.0
    %265 = vmatpush.msra.mxu0 0.0
    %266 = vmatpush.msra.mxu0 0.0
    %267 = vmatpush.msra.mxu0 0.0
    %268 = vmatpush.msra.mxu0 0.0
    %269 = vmatpush.msra.mxu0 0.0
    %270 = vmatpush.msra.mxu0 %v110
    %271 = vmatpush.msra.mxu0 %v109
    %272 = vmatpush.msra.mxu0 %v108
    %273 = vmatpush.msra.mxu0 %v107
    %274 = vmatmul.f32.gmra.mxu0 %v256
    %v275 = vpop.f32.mrf.mxu0
    %v276 = vadd.f32 0.0, %v275
    %277 = vdwg.mxu0
    %v278 = vadd.f32 %v90, %v276
    %v279 = vxor.u32 %v278, 2147483648
    %v280 = vmul.f32 %v279, 1.442695
    %v281 = vpow.pop %v280
    %v282 = vadd.f32 %v281, 1.0
    %v283 = vrcp.pop %v282
    %v284 = vmul.f32 %v282, %v283
    %v285 = vsub.f32 1.0, %v284
    %v286 = vmul.f32 %v283, %v285
    %v287 = vadd.f32 %v283, %v286
    %vm288 = vweird.f32 %v282
    %vm289 = vweird.f32 %v283
    %vm290 = vmor %vm288, %vm289
    %v291 = vsel %vm290, %v283, %v287
    %v292 = vand.u32 2147483647, %v282
    %vm293 = vcmp.eq.f32.partialorder %v292, 8.507059e+37
    %v294 = vand.u32 %v282, 2147483648
    %v295 = vor.u32 1.1754944e-38, %v294
    %v296 = vsel %vm293, %v295, %v291
    %v297 = vmul.f32 1.0, %v296
    %v298 = vtanh.pop %v278
    %v299 = vmul.f32 %v297, %v252
    %301 = vrot.lane.b32.xlu0 %v298, 64
    %v302 = vpop.permute.xlu0 %301
    %v304 = vmul.f32 %v297, %v302
    %306 = vrot.lane.b32.xlu0 %v304, 32
    %v307 = vpop.permute.xlu0 %306
    %v309 = vadd.f32 %v299, %v307
    %v310 = vtanh.pop %v309
    %312 = vrot.lane.b32.xlu0 %v310, 64
    %v313 = vpop.permute.xlu0 %312
    %v315 = vmul.f32 %v297, %v313
    %vm316 = vcmp.gt.s32.totalorder %v111, 2
    %v317 = vsel %vm316, 1, 0
    %318 = vset.pattern.permute.xlu0 0
    %319 = vperm.xlu0 %318, %v317
    %v320 = vpop.permute.xlu0 %319
    %vm321 = vcmp.eq.s32.totalorder %v320, 1
    %v322 = vsel %vm321, %v315, %v251
    %v323 = vsel %vm321, %v309, %v252
    %325 = vrot.lane.b32.xlu0 %v322, 32
    %v326 = vpop.permute.xlu0 %325
    %v327 = vsel %vm112, %v326, 0
    %329 = vmatpush.msra.mxu0 0.0
    %330 = vmatpush.msra.mxu0 0.0
    %331 = vmatpush.msra.mxu0 0.0
    %332 = vmatpush.msra.mxu0 0.0
    %333 = vmatpush.msra.mxu0 0.0
    %334 = vmatpush.msra.mxu0 0.0
    %335 = vmatpush.msra.mxu0 0.0
    %336 = vmatpush.msra.mxu0 0.0
    %337 = vmatpush.msra.mxu0 0.0
    %338 = vmatpush.msra.mxu0 0.0
    %339 = vmatpush.msra.mxu0 0.0
    %340 = vmatpush.msra.mxu0 0.0
    %341 = vmatpush.msra.mxu0 %v110
    %342 = vmatpush.msra.mxu0 %v109
    %343 = vmatpush.msra.mxu0 %v108
    %344 = vmatpush.msra.mxu0 %v107
    %345 = vmatmul.f32.gmra.mxu0 %v327
    %v346 = vpop.f32.mrf.mxu0
    %v347 = vadd.f32 0.0, %v346
    %348 = vdwg.mxu0
    %v349 = vadd.f32 %v93, %v347
    %v350 = vxor.u32 %v349, 2147483648
    %v351 = vmul.f32 %v350, 1.442695
    %v352 = vpow.pop %v351
    %v353 = vadd.f32 %v352, 1.0
    %v354 = vrcp.pop %v353
    %v355 = vmul.f32 %v353, %v354
    %v356 = vsub.f32 1.0, %v355
    %v357 = vmul.f32 %v354, %v356
    %v358 = vadd.f32 %v354, %v357
    %vm359 = vweird.f32 %v353
    %vm360 = vweird.f32 %v354
    %vm361 = vmor %vm359, %vm360
    %v362 = vsel %vm361, %v354, %v358
    %v363 = vand.u32 2147483647, %v353
    %vm364 = vcmp.eq.f32.partialorder %v363, 8.507059e+37
    %v365 = vand.u32 %v353, 2147483648
    %v366 = vor.u32 1.1754944e-38, %v365
    %v367 = vsel %vm364, %v366, %v362
    %v368 = vmul.f32 1.0, %v367
    %v369 = vtanh.pop %v349
    %v370 = vmul.f32 %v368, %v323
    %372 = vrot.lane.b32.xlu0 %v369, 64
    %v373 = vpop.permute.xlu0 %372
    %v375 = vmul.f32 %v368, %v373
    %377 = vrot.lane.b32.xlu0 %v375, 32
    %v378 = vpop.permute.xlu0 %377
    %v380 = vadd.f32 %v370, %v378
    %v381 = vtanh.pop %v380
    %383 = vrot.lane.b32.xlu0 %v381, 64
    %v384 = vpop.permute.xlu0 %383
    %v386 = vmul.f32 %v368, %v384
    %vm387 = vcmp.gt.s32.totalorder %v111, 3
    %v388 = vsel %vm387, 1, 0
    %389 = vset.pattern.permute.xlu0 0
    %390 = vperm.xlu0 %389, %v388
    %v391 = vpop.permute.xlu0 %390
    %vm392 = vcmp.eq.s32.totalorder %v391, 1
    %v393 = vsel %vm392, %v386, %v322
    %v394 = vsel %vm392, %v380, %v323
    %396 = vrot.lane.b32.xlu0 %v393, 32
    %v397 = vpop.permute.xlu0 %396
    %v398 = vsel %vm112, %v397, 0
    %400 = vmatpush.msra.mxu0 0.0
    %401 = vmatpush.msra.mxu0 0.0
    %402 = vmatpush.msra.mxu0 0.0
    %403 = vmatpush.msra.mxu0 0.0
    %404 = vmatpush.msra.mxu0 0.0
    %405 = vmatpush.msra.mxu0 0.0
    %406 = vmatpush.msra.mxu0 0.0
    %407 = vmatpush.msra.mxu0 0.0
    %408 = vmatpush.msra.mxu0 0.0
    %409 = vmatpush.msra.mxu0 0.0
    %410 = vmatpush.msra.mxu0 0.0
    %411 = vmatpush.msra.mxu0 0.0
    %412 = vmatpush.msra.mxu0 %v110
    %413 = vmatpush.msra.mxu0 %v109
    %414 = vmatpush.msra.mxu0 %v108
    %415 = vmatpush.msra.mxu0 %v107
    %416 = vmatmul.f32.gmra.mxu0 %v398
    %v417 = vpop.f32.mrf.mxu0
    %v418 = vadd.f32 0.0, %v417
    %419 = vdwg.mxu0
    %v420 = vadd.f32 %v96, %v418
    %v421 = vxor.u32 %v420, 2147483648
    %v422 = vmul.f32 %v421, 1.442695
    %v423 = vpow.pop %v422
    %v424 = vadd.f32 %v423, 1.0
    %v425 = vrcp.pop %v424
    %v426 = vmul.f32 %v424, %v425
    %v427 = vsub.f32 1.0, %v426
    %v428 = vmul.f32 %v425, %v427
    %v429 = vadd.f32 %v425, %v428
    %vm430 = vweird.f32 %v424
    %vm431 = vweird.f32 %v425
    %vm432 = vmor %vm430, %vm431
    %v433 = vsel %vm432, %v425, %v429
    %v434 = vand.u32 2147483647, %v424
    %vm435 = vcmp.eq.f32.partialorder %v434, 8.507059e+37
    %v436 = vand.u32 %v424, 2147483648
    %v437 = vor.u32 1.1754944e-38, %v436
    %v438 = vsel %vm435, %v437, %v433
    %v439 = vmul.f32 1.0, %v438
    %v440 = vtanh.pop %v420
    %v441 = vmul.f32 %v439, %v394
    %443 = vrot.lane.b32.xlu0 %v440, 64
    %v444 = vpop.permute.xlu0 %443
    %v446 = vmul.f32 %v439, %v444
    %448 = vrot.lane.b32.xlu0 %v446, 32
    %v449 = vpop.permute.xlu0 %448
    %v451 = vadd.f32 %v441, %v449
    %v452 = vtanh.pop %v451
    %454 = vrot.lane.b32.xlu0 %v452, 64
    %v455 = vpop.permute.xlu0 %454
    %v457 = vmul.f32 %v439, %v455
    %vm458 = vcmp.gt.s32.totalorder %v111, 4
    %v459 = vsel %vm458, 1, 0
    %460 = vset.pattern.permute.xlu0 0
    %461 = vperm.xlu0 %460, %v459
    %v462 = vpop.permute.xlu0 %461
    %vm463 = vcmp.eq.s32.totalorder %v462, 1
    %v464 = vsel %vm463, %v457, %v393
    %v465 = vsel %vm463, %v451, %v394
    %467 = vrot.lane.b32.xlu0 %v464, 32
    %v468 = vpop.permute.xlu0 %467
    %v469 = vsel %vm112, %v468, 0
    %471 = vmatpush.msra.mxu0 0.0
    %472 = vmatpush.msra.mxu0 0.0
    %473 = vmatpush.msra.mxu0 0.0
    %474 = vmatpush.msra.mxu0 0.0
    %475 = vmatpush.msra.mxu0 0.0
    %476 = vmatpush.msra.mxu0 0.0
    %477 = vmatpush.msra.mxu0 0.0
    %478 = vmatpush.msra.mxu0 0.0
    %479 = vmatpush.msra.mxu0 0.0
    %480 = vmatpush.msra.mxu0 0.0
    %481 = vmatpush.msra.mxu0 0.0
    %482 = vmatpush.msra.mxu0 0.0
    %483 = vmatpush.msra.mxu0 %v110
    %484 = vmatpush.msra.mxu0 %v109
    %485 = vmatpush.msra.mxu0 %v108
    %486 = vmatpush.msra.mxu0 %v107
    %487 = vmatmul.f32.gmra.mxu0 %v469
    %v488 = vpop.f32.mrf.mxu0
    %v489 = vadd.f32 0.0, %v488
    %490 = vdwg.mxu0
    %v491 = vadd.f32 %v99, %v489
    %v492 = vxor.u32 %v491, 2147483648
    %v493 = vmul.f32 %v492, 1.442695
    %v494 = vpow.pop %v493
    %v495 = vadd.f32 %v494, 1.0
    %v496 = vrcp.pop %v495
    %v497 = vmul.f32 %v495, %v496
    %v498 = vsub.f32 1.0, %v497
    %v499 = vmul.f32 %v496, %v498
    %v500 = vadd.f32 %v496, %v499
    %vm501 = vweird.f32 %v495
    %vm502 = vweird.f32 %v496
    %vm503 = vmor %vm501, %vm502
    %v504 = vsel %vm503, %v496, %v500
    %v505 = vand.u32 2147483647, %v495
    %vm506 = vcmp.eq.f32.partialorder %v505, 8.507059e+37
    %v507 = vand.u32 %v495, 2147483648
    %v508 = vor.u32 1.1754944e-38, %v507
    %v509 = vsel %vm506, %v508, %v504
    %v510 = vmul.f32 1.0, %v509
    %v511 = vtanh.pop %v491
    %v512 = vmul.f32 %v510, %v465
    %514 = vrot.lane.b32.xlu0 %v511, 64
    %v515 = vpop.permute.xlu0 %514
    %v517 = vmul.f32 %v510, %v515
    %519 = vrot.lane.b32.xlu0 %v517, 32
    %v520 = vpop.permute.xlu0 %519
    %v522 = vadd.f32 %v512, %v520
    %v523 = vtanh.pop %v522
    %525 = vrot.lane.b32.xlu0 %v523, 64
    %v526 = vpop.permute.xlu0 %525
    %v528 = vmul.f32 %v510, %v526
    %vm529 = vcmp.gt.s32.totalorder %v111, 5
    %v530 = vsel %vm529, 1, 0
    %531 = vset.pattern.permute.xlu0 0
    %532 = vperm.xlu0 %531, %v530
    %v533 = vpop.permute.xlu0 %532
    %vm534 = vcmp.eq.s32.totalorder %v533, 1
    %v535 = vsel %vm534, %v528, %v464
    %v536 = vsel %vm534, %v522, %v465
    %538 = vrot.lane.b32.xlu0 %v535, 32
    %v539 = vpop.permute.xlu0 %538
    %v540 = vsel %vm112, %v539, 0
    %542 = vmatpush.msra.mxu0 0.0
    %543 = vmatpush.msra.mxu0 0.0
    %544 = vmatpush.msra.mxu0 0.0
    %545 = vmatpush.msra.mxu0 0.0
    %546 = vmatpush.msra.mxu0 0.0
    %547 = vmatpush.msra.mxu0 0.0
    %548 = vmatpush.msra.mxu0 0.0
    %549 = vmatpush.msra.mxu0 0.0
    %550 = vmatpush.msra.mxu0 0.0
    %551 = vmatpush.msra.mxu0 0.0
    %552 = vmatpush.msra.mxu0 0.0
    %553 = vmatpush.msra.mxu0 0.0
    %554 = vmatpush.msra.mxu0 %v110
    %555 = vmatpush.msra.mxu0 %v109
    %556 = vmatpush.msra.mxu0 %v108
    %557 = vmatpush.msra.mxu0 %v107
    %558 = vmatmul.f32.gmra.mxu0 %v540
    %v559 = vpop.f32.mrf.mxu0
    %v560 = vadd.f32 0.0, %v559
    %561 = vdwg.mxu0
    %v562 = vadd.f32 %v102, %v560
    %v563 = vxor.u32 %v562, 2147483648
    %v564 = vmul.f32 %v563, 1.442695
    %v565 = vpow.pop %v564
    %v566 = vadd.f32 %v565, 1.0
    %v567 = vrcp.pop %v566
    %v568 = vmul.f32 %v566, %v567
    %v569 = vsub.f32 1.0, %v568
    %v570 = vmul.f32 %v567, %v569
    %v571 = vadd.f32 %v567, %v570
    %vm572 = vweird.f32 %v566
    %vm573 = vweird.f32 %v567
    %vm574 = vmor %vm572, %vm573
    %v575 = vsel %vm574, %v567, %v571
    %v576 = vand.u32 2147483647, %v566
    %vm577 = vcmp.eq.f32.partialorder %v576, 8.507059e+37
    %v578 = vand.u32 %v566, 2147483648
    %v579 = vor.u32 1.1754944e-38, %v578
    %v580 = vsel %vm577, %v579, %v575
    %v581 = vmul.f32 1.0, %v580
    %v582 = vtanh.pop %v562
    %v583 = vmul.f32 %v581, %v536
    %585 = vrot.lane.b32.xlu0 %v582, 64
    %v586 = vpop.permute.xlu0 %585
    %v588 = vmul.f32 %v581, %v586
    %590 = vrot.lane.b32.xlu0 %v588, 32
    %v591 = vpop.permute.xlu0 %590
    %v593 = vadd.f32 %v583, %v591
    %v594 = vtanh.pop %v593
    %596 = vrot.lane.b32.xlu0 %v594, 64
    %v597 = vpop.permute.xlu0 %596
    %v599 = vmul.f32 %v581, %v597
    %vm600 = vcmp.gt.s32.totalorder %v111, 6
    %v601 = vsel %vm600, 1, 0
    %602 = vset.pattern.permute.xlu0 0
    %603 = vperm.xlu0 %602, %v601
    %v604 = vpop.permute.xlu0 %603
    %vm605 = vcmp.eq.s32.totalorder %v604, 1
    %v606 = vsel %vm605, %v599, %v535
    %v607 = vsel %vm605, %v593, %v536
    %609 = vrot.lane.b32.xlu0 %v606, 32
    %v610 = vpop.permute.xlu0 %609
    %v611 = vsel %vm112, %v610, 0
    %613 = vmatpush.msra.mxu0 0.0
    %614 = vmatpush.msra.mxu0 0.0
    %615 = vmatpush.msra.mxu0 0.0
    %616 = vmatpush.msra.mxu0 0.0
    %617 = vmatpush.msra.mxu0 0.0
    %618 = vmatpush.msra.mxu0 0.0
    %619 = vmatpush.msra.mxu0 0.0
    %620 = vmatpush.msra.mxu0 0.0
    %621 = vmatpush.msra.mxu0 0.0
    %622 = vmatpush.msra.mxu0 0.0
    %623 = vmatpush.msra.mxu0 0.0
    %624 = vmatpush.msra.mxu0 0.0
    %625 = vmatpush.msra.mxu0 %v110
    %626 = vmatpush.msra.mxu0 %v109
    %627 = vmatpush.msra.mxu0 %v108
    %628 = vmatpush.msra.mxu0 %v107
    %629 = vmatmul.f32.gmra.mxu0 %v611
    %v630 = vpop.f32.mrf.mxu0
    %v631 = vadd.f32 0.0, %v630
    %632 = vdwg.mxu0
    %v633 = vadd.f32 %v105, %v631
    %v634 = vxor.u32 %v633, 2147483648
    %v635 = vmul.f32 %v634, 1.442695
    %v636 = vpow.pop %v635
    %v637 = vadd.f32 %v636, 1.0
    %v638 = vrcp.pop %v637
    %v639 = vmul.f32 %v637, %v638
    %v640 = vsub.f32 1.0, %v639
    %v641 = vmul.f32 %v638, %v640
    %v642 = vadd.f32 %v638, %v641
    %vm643 = vweird.f32 %v637
    %vm644 = vweird.f32 %v638
    %vm645 = vmor %vm643, %vm644
    %v646 = vsel %vm645, %v638, %v642
    %v647 = vand.u32 2147483647, %v637
    %vm648 = vcmp.eq.f32.partialorder %v647, 8.507059e+37
    %v649 = vand.u32 %v637, 2147483648
    %v650 = vor.u32 1.1754944e-38, %v649
    %v651 = vsel %vm648, %v650, %v646
    %v652 = vmul.f32 1.0, %v651
    %v653 = vtanh.pop %v633
    %v654 = vmul.f32 %v652, %v607
    %656 = vrot.lane.b32.xlu0 %v653, 64
    %v657 = vpop.permute.xlu0 %656
    %v659 = vmul.f32 %v652, %v657
    %661 = vrot.lane.b32.xlu0 %v659, 32
    %v662 = vpop.permute.xlu0 %661
    %v664 = vadd.f32 %v654, %v662
    %v665 = vtanh.pop %v664
    %667 = vrot.lane.b32.xlu0 %v665, 64
    %v668 = vpop.permute.xlu0 %667
    %v670 = vmul.f32 %v652, %v668
    %vm671 = vcmp.gt.s32.totalorder %v111, 7
    %v672 = vsel %vm671, 1, 0
    %673 = vset.pattern.permute.xlu0 0
    %674 = vperm.xlu0 %673, %v672
    %v675 = vpop.permute.xlu0 %674
    %vm676 = vcmp.eq.s32.totalorder %v675, 1
    %v677 = vsel %vm676, %v670, %v606
    %v678 = vld [vmem:[%s5] sm:$0xff]
    %v679 = vld [vmem:[%s5 + $0x8] sm:$0xff]
    %v680 = vld [vmem:[%s5 + $0x10] sm:$0xff]
    %v681 = vld [vmem:[%s5 + $0x18] sm:$0xff]
    %v682 = vld [vmem:[%s6] sm:$0x1]
    %v684 = vperm.slane %v682, 0
    %687 = vrot.lane.b32.xlu0 %v677, 32
    %v688 = vpop.permute.xlu0 %687
    %v689 = vsel %vm112, %v688, 0
    %691 = vmatpush.msra.mxu0 0.0
    %692 = vmatpush.msra.mxu0 0.0
    %693 = vmatpush.msra.mxu0 0.0
    %694 = vmatpush.msra.mxu0 0.0
    %695 = vmatpush.msra.mxu0 0.0
    %696 = vmatpush.msra.mxu0 0.0
    %697 = vmatpush.msra.mxu0 0.0
    %698 = vmatpush.msra.mxu0 0.0
    %699 = vmatpush.msra.mxu0 0.0
    %700 = vmatpush.msra.mxu0 0.0
    %701 = vmatpush.msra.mxu0 0.0
    %702 = vmatpush.msra.mxu0 0.0
    %703 = vmatpush.msra.mxu0 %v681
    %704 = vmatpush.msra.mxu0 %v680
    %705 = vmatpush.msra.mxu0 %v679
    %706 = vmatpush.msra.mxu0 %v678
    %707 = vmatmul.f32.gmra.mxu0 %v689
    %v708 = vpop.f32.mrf.mxu0
    %v709 = vadd.f32 %v684, %v708
    %710 = vdwg.mxu0
    %711 = vst [vmem:[#allocation2] sm:$0xff] %v709
    // Predicated region
    $region30: #{tpu_custom_call.1} parent=1 // pred_check
      _
    $region31: #{tpu_custom_call.1} parent=1 // pred_check_branch
      %713 = sbr.rel (0) target = $region33
    $region32: #{tpu_custom_call.1} parent=1 // pred_region
      %715 = vsyncadd [#allocation3], 0
      %s717 = sshll.u32 [#allocation2], 4
      %s718 = int_to_ptr.vmem [resolvable:$true] %s717
      %s719 = sshll.u32 %s7, 4
      %s720 = int_to_ptr.hbm [resolvable:$true] %s719
      %722 = dma.vmem_to_hbm [thread:$0]  %s718, 128, %s720, [#allocation3]
    $region33: #{tpu_custom_call.1} parent=1 // pred_fallthru
      _
    // Predicated region
    $region34: #{tpu_custom_call.1} parent=1 // pred_check
      _
    $region35: #{tpu_custom_call.1} parent=1 // pred_check_branch
      %724 = sbr.rel (0) target = $region37
    $region36: #{tpu_custom_call.1} parent=1 // pred_region
      %726 = dma.done [#allocation3], 128
    $region37: #{tpu_custom_call.1} parent=1 // pred_fallthru
      _
    %727 = vsyncpa [#allocation3], 1

</llo_original>
